<compile_context>
chip_gen: v5e
topology: v5e:2x2
jax: 0.10.0
libtpu: 0.0.40
codegen_flags: <defaults>
</compile_context>

<pallas_src>
import functools

import jax
import jax.numpy as jnp
from jax.experimental import pallas as pl
from jax.experimental.pallas import tpu as pltpu


def _cdiv(a, b):
    return (a + b - 1) // b


def _round_up(a, b):
    return _cdiv(a, b) * b


def _focal_kernel(xt_ref, lab_ref, out_ref, acc_ref, *,
                  gamma, a0, a1, n_valid, tr):
    p = pl.program_id(0)
    k = pl.program_id(1)

    @pl.when(k == 0)
    def _init():
        acc_ref[...] = jnp.zeros_like(acc_ref)

    x = xt_ref[...].astype(jnp.float32)        # (C, TR, 128) class planes
    lab = lab_ref[...].astype(jnp.float32)     # (TR, 128) binary labels {0,1}
    is_one = lab > 0.5

    C = x.shape[0]
    if C == 2:
        # closed-form binary logsumexp: fewer EUP (exp/log) ops per element
        x0, x1 = x[0], x[1]
        lse = jnp.maximum(x0, x1) + jnp.log(1.0 + jnp.exp(-jnp.abs(x1 - x0)))
        sel = jnp.where(is_one, x1, x0)
    else:
        m = jnp.max(x, axis=0)
        lse = m + jnp.log(jnp.sum(jnp.exp(x - m[None, :, :]), axis=0))
        sel = jnp.where(is_one, x[1], x[0])    # gather(1, label), label in {0,1}

    logpt = sel - lse
    pt = jnp.exp(logpt)
    at = jnp.where(is_one, a1, a0)             # alpha gather: [alpha, 1-alpha]

    om = 1.0 - pt
    if float(gamma) == float(int(gamma)) and int(gamma) >= 0:
        w = jnp.ones_like(om)
        for _ in range(int(gamma)):            # static unroll for integer gamma
            w = w * om
    else:
        w = jnp.power(om, jnp.float32(gamma))

    loss = -w * (logpt * at)

    # in-kernel validity mask (padded tail of the flattened rows) — no mask in HBM
    tile = p * pl.num_programs(1) + k
    base = tile * (tr * 128)
    row = jax.lax.broadcasted_iota(jnp.int32, (tr, 128), 0)
    lane = jax.lax.broadcasted_iota(jnp.int32, (tr, 128), 1)
    valid = (base + row * 128 + lane) < n_valid
    loss = jnp.where(valid, loss, 0.0)

    # fold the (TR,128) tile into a single (8,128) vreg-sized accumulator
    acc_ref[...] += loss.reshape(tr // 8, 8, 128).sum(axis=0)

    @pl.when(k == pl.num_programs(1) - 1)
    def _fin():
        out_ref[0] = acc_ref[...]              # per-core partial-sum slab


def focal_loss_pallas(x, target, gamma=2, alpha=0.25, size_average=True,
                      num_classes=15):
    x = jnp.asarray(x)

    # --- glue matching the torch forward exactly ---
    tgt = jnp.squeeze(jax.nn.one_hot(target.astype(jnp.int32), num_classes,
                                     dtype=jnp.int32))
    labels = tgt.reshape(-1)                   # (M,) binary 0/1

    if x.ndim > 2:
        B, C = x.shape[0], x.shape[1]
        # single leading-axis permute (no lane-crossing transpose):
        # (B, C, HW) -> (C, B, HW) -> (C, M)
        xt = jnp.transpose(x.reshape(B, C, -1), (1, 0, 2)).reshape(C, -1)
    else:
        C = x.shape[1]
        xt = jnp.transpose(x, (1, 0))
    M = int(xt.shape[1])
    assert labels.shape[0] == M, "B*H*W must equal N*num_classes"

    lab = labels.astype(x.dtype)               # keep HBM traffic in input dtype

    LANE = 128
    itemsize = jnp.dtype(x.dtype).itemsize
    SUB = 8 if itemsize >= 4 else (16 if itemsize == 2 else 32)

    P = 2                                      # v7x megacore split; harmless on 1-TC chips
    R0 = _cdiv(M, LANE)
    # row-tile: as large as possible (HBM roofline) but keep x tile <= ~4 MiB
    bytes_per_row = C * LANE * itemsize
    tr_vmem = max(SUB, ((4 << 20) // bytes_per_row) // SUB * SUB)
    tr_need = _round_up(_cdiv(R0, P), SUB)
    TR = max(SUB, min(512, tr_vmem, tr_need))

    K = _cdiv(R0, P * TR)                      # row tiles per core
    R_pad = P * TR * K
    M_pad = R_pad * LANE

    xt_p = jnp.pad(xt, ((0, 0), (0, M_pad - M))).reshape(C, R_pad, LANE)
    lab_p = jnp.pad(lab, (0, M_pad - M)).reshape(R_pad, LANE)

    kernel = functools.partial(_focal_kernel, gamma=float(gamma),
                               a0=float(alpha), a1=float(1.0 - alpha),
                               n_valid=M, tr=int(TR))

    out = pl.pallas_call(
        kernel,
        out_shape=jax.ShapeDtypeStruct((P, 8, LANE), jnp.float32),
        grid_spec=pltpu.PrefetchScalarGridSpec(
            num_scalar_prefetch=0,
            grid=(P, K),
            in_specs=[
                pl.BlockSpec((C, TR, LANE), lambda p, k: (0, p * K + k, 0)),
                pl.BlockSpec((TR, LANE), lambda p, k: (p * K + k, 0)),
            ],
            out_specs=pl.BlockSpec((1, 8, LANE), lambda p, k: (p, 0, 0)),
            scratch_shapes=[pltpu.VMEM((8, LANE), jnp.float32)],
        ),
        compiler_params=pltpu.CompilerParams(
            dimension_semantics=("parallel", "arbitrary")),
    )(xt_p, lab_p)

    total = jnp.sum(out)
    return total / M if size_average else total


def focal_loss_ref(x, target, gamma=2, alpha=0.25, size_average=True,
                   num_classes=15):
    """Pure-JAX reference mirroring the PyTorch forward."""
    tgt = jnp.squeeze(jax.nn.one_hot(target.astype(jnp.int32), num_classes,
                                     dtype=jnp.int32))
    if x.ndim > 2:
        B, C = x.shape[0], x.shape[1]
        xf = jnp.transpose(x.reshape(B, C, -1), (0, 2, 1)).reshape(-1, C)
    else:
        xf = x
    lab = tgt.reshape(-1)
    logpt_all = jax.nn.log_softmax(xf.astype(jnp.float32), axis=1)
    logpt = jnp.take_along_axis(logpt_all, lab[:, None], axis=1)[:, 0]
    pt = jnp.exp(logpt)
    alpha_vec = jnp.array([alpha, 1.0 - alpha], jnp.float32)
    at = alpha_vec[lab]
    logpt = logpt * at
    loss = -((1.0 - pt) ** gamma) * logpt
    return loss.mean() if size_average else loss.sum()


if __name__ == "__main__":
    key = jax.random.PRNGKey(0)
    kx, kt = jax.random.split(key)

    num_classes = 15
    # NCHW input with 2 binary logits per (sample, class) cell: B*H*W = 2*15*4 = 120
    x = jax.random.normal(kx, (2, 2, 15, 4), dtype=jnp.float32)
    # N targets such that N * num_classes == B*H*W  ->  N = 8
    target = jax.random.randint(kt, (8,), 0, num_classes)

    out = focal_loss_pallas(x, target, gamma=2, alpha=0.25,
                            size_average=True, num_classes=num_classes)
    out = jax.block_until_ready(out)

    ref = focal_loss_ref(x, target, gamma=2, alpha=0.25,
                         size_average=True, num_classes=num_classes)
    assert jnp.allclose(out, ref, atol=1e-5, rtol=1e-5), (out, ref)

    print("KERNEL_OK")
</pallas_src>

<mosaic_0001>
module attributes {stable_mosaic.version = 11 : i64} {
  func.func @_focal_kernel(%arg0: i32, %arg1: i32, %arg2: memref<2x8x128xf32, #tpu.memory_space<vmem>>, %arg3: memref<8x128xf32, #tpu.memory_space<vmem>>, %arg4: memref<1x8x128xf32, #tpu.memory_space<vmem>>, %arg5: memref<8x128xf32, #tpu.memory_space<vmem>>) attributes {dimension_semantics = [#tpu.dimension_semantics<parallel>, #tpu.dimension_semantics<arbitrary>], iteration_bounds = array<i64: 2, 1>, scalar_prefetch = 0 : i64, scratch_operands = 1 : i64, tpu.core_type = #tpu.core_type<tc>, window_params = [{transform_indices = @transform_0, window_bounds = array<i64: 2, 8, 128>}, {transform_indices = @transform_1, window_bounds = array<i64: 8, 128>}, {transform_indices = @transform_2, window_bounds = array<i64: 1, 8, 128>}]} {
    %c0_i32 = arith.constant 0 : i32
    %0 = arith.cmpi eq, %arg1, %c0_i32 : i32
    %1 = arith.extui %0 : i1 to i32
    %c0_i32_0 = arith.constant 0 : i32
    %2 = arith.cmpi ne, %1, %c0_i32_0 : i32
    scf.if %2 {
      %cst_20 = arith.constant 0.000000e+00 : f32
      %58 = vector.broadcast %cst_20 : f32 to vector<8x128xf32>
      %c0_21 = arith.constant 0 : index
      %c0_22 = arith.constant 0 : index
      %59 = vector.load %arg5[%c0_21, %c0_22] : memref<8x128xf32, #tpu.memory_space<vmem>>, vector<8x128xf32>
      tpu.vector_store %arg5[%c0_21, %c0_22], %58 {strides = array<i32>} : memref<8x128xf32, #tpu.memory_space<vmem>>, vector<8x128xf32>,
    } else {
    }
    %c0 = arith.constant 0 : index
    %c0_1 = arith.constant 0 : index
    %c0_2 = arith.constant 0 : index
    %3 = vector.load %arg2[%c0, %c0_1, %c0_2] : memref<2x8x128xf32, #tpu.memory_space<vmem>>, vector<2x8x128xf32>
    %c0_3 = arith.constant 0 : index
    %c0_4 = arith.constant 0 : index
    %4 = vector.load %arg3[%c0_3, %c0_4] : memref<8x128xf32, #tpu.memory_space<vmem>>, vector<8x128xf32>
    %cst = arith.constant 5.000000e-01 : f32
    %5 = vector.broadcast %cst : f32 to vector<8x128xf32>
    %6 = arith.cmpf ogt, %4, %5 : vector<8x128xf32>
    %7 = vector.extract_strided_slice %3 {offsets = [0, 0, 0], sizes = [1, 8, 128], strides = [1, 1, 1]} : vector<2x8x128xf32> to vector<1x8x128xf32>
    %8 = vector.shape_cast %7 : vector<1x8x128xf32> to vector<8x128xf32>
    %9 = vector.extract_strided_slice %3 {offsets = [1, 0, 0], sizes = [1, 8, 128], strides = [1, 1, 1]} : vector<2x8x128xf32> to vector<1x8x128xf32>
    %10 = vector.shape_cast %9 : vector<1x8x128xf32> to vector<8x128xf32>
    %11 = arith.maximumf %8, %10 : vector<8x128xf32>
    %12 = arith.subf %10, %8 : vector<8x128xf32>
    %13 = math.absf %12 : vector<8x128xf32>
    %cst_5 = arith.constant 0.000000e+00 : f32
    %14 = vector.broadcast %cst_5 : f32 to vector<8x128xf32>
    %15 = arith.subf %14, %13 : vector<8x128xf32>
    %16 = math.exp %15 : vector<8x128xf32>
    %cst_6 = arith.constant 1.000000e+00 : f32
    %17 = vector.broadcast %cst_6 : f32 to vector<8x128xf32>
    %18 = arith.addf %17, %16 : vector<8x128xf32>
    %19 = math.log %18 : vector<8x128xf32>
    %20 = arith.addf %11, %19 : vector<8x128xf32>
    %21 = arith.select %6, %10, %8 : vector<8x128xi1>, vector<8x128xf32>
    %22 = arith.subf %21, %20 : vector<8x128xf32>
    %23 = math.exp %22 : vector<8x128xf32>
    %cst_7 = arith.constant 7.500000e-01 : f32
    %cst_8 = arith.constant 2.500000e-01 : f32
    %24 = vector.broadcast %cst_7 : f32 to vector<8x128xf32>
    %25 = vector.broadcast %cst_8 : f32 to vector<8x128xf32>
    %26 = arith.select %6, %24, %25 : vector<8x128xi1>, vector<8x128xf32>
    %cst_9 = arith.constant 1.000000e+00 : f32
    %27 = vector.broadcast %cst_9 : f32 to vector<8x128xf32>
    %28 = arith.subf %27, %23 : vector<8x128xf32>
    %cst_10 = arith.constant 1.000000e+00 : f32
    %29 = vector.broadcast %cst_10 : f32 to vector<8x128xf32>
    %30 = arith.mulf %29, %28 : vector<8x128xf32>
    %31 = arith.mulf %30, %28 : vector<8x128xf32>
    %cst_11 = arith.constant 0.000000e+00 : f32
    %32 = vector.broadcast %cst_11 : f32 to vector<8x128xf32>
    %33 = arith.subf %32, %31 : vector<8x128xf32>
    %34 = arith.mulf %22, %26 : vector<8x128xf32>
    %35 = arith.mulf %33, %34 : vector<8x128xf32>
    %c1_i32 = arith.constant 1 : i32
    %36 = arith.muli %arg0, %c1_i32 : i32
    %37 = arith.addi %36, %arg1 : i32
    %c1024_i32 = arith.constant 1024 : i32
    %38 = arith.muli %37, %c1024_i32 : i32
    %39 = tpu.iota {dimensions = array<i32: 0>} : vector<8x128xi32>
    %40 = tpu.iota {dimensions = array<i32: 1>} : vector<8x128xi32>
    %c128_i32 = arith.constant 128 : i32
    %41 = vector.broadcast %c128_i32 : i32 to vector<8x128xi32>
    %42 = arith.muli %39, %41 : vector<8x128xi32>
    %43 = vector.broadcast %38 : i32 to vector<8x128xi32>
    %44 = arith.addi %43, %42 : vector<8x128xi32>
    %45 = arith.addi %44, %40 : vector<8x128xi32>
    %c120_i32 = arith.constant 120 : i32
    %46 = vector.broadcast %c120_i32 : i32 to vector<8x128xi32>
    %47 = arith.cmpi slt, %45, %46 : vector<8x128xi32>
    %cst_12 = arith.constant 0.000000e+00 : f32
    %48 = vector.broadcast %cst_12 : f32 to vector<8x128xf32>
    %49 = arith.select %47, %35, %48 : vector<8x128xi1>, vector<8x128xf32>
    %c0_13 = arith.constant 0 : index
    %c0_14 = arith.constant 0 : index
    %50 = vector.load %arg5[%c0_13, %c0_14] : memref<8x128xf32, #tpu.memory_space<vmem>>, vector<8x128xf32>
    %51 = vector.shape_cast %49 : vector<8x128xf32> to vector<1x8x128xf32>
    %cst_15 = arith.constant dense<0.000000e+00> : vector<8x128xf32>
    %52 = vector.multi_reduction <add>, %51, %cst_15 [0] : vector<1x8x128xf32> to vector<8x128xf32>
    %53 = arith.addf %50, %52 : vector<8x128xf32>
    %c0_16 = arith.constant 0 : index
    %c0_17 = arith.constant 0 : index
    %54 = vector.load %arg5[%c0_16, %c0_17] : memref<8x128xf32, #tpu.memory_space<vmem>>, vector<8x128xf32>
    tpu.vector_store %arg5[%c0_16, %c0_17], %53 {strides = array<i32>} : memref<8x128xf32, #tpu.memory_space<vmem>>, vector<8x128xf32>,
    %c0_i32_18 = arith.constant 0 : i32
    %55 = arith.cmpi eq, %arg1, %c0_i32_18 : i32
    %56 = arith.extui %55 : i1 to i32
    %c0_i32_19 = arith.constant 0 : i32
    %57 = arith.cmpi ne, %56, %c0_i32_19 : i32
    scf.if %57 {
      %c0_20 = arith.constant 0 : index
      %c0_21 = arith.constant 0 : index
      %58 = vector.load %arg5[%c0_20, %c0_21] : memref<8x128xf32, #tpu.memory_space<vmem>>, vector<8x128xf32>
      %c0_22 = arith.constant 0 : index
      %c0_23 = arith.constant 0 : index
      %c0_24 = arith.constant 0 : index
      %59 = vector.load %arg4[%c0_22, %c0_23, %c0_24] : memref<1x8x128xf32, #tpu.memory_space<vmem>>, vector<1x8x128xf32>
      %60 = vector.shape_cast %59 : vector<1x8x128xf32> to vector<8x128xf32>
      %61 = vector.shape_cast %58 : vector<8x128xf32> to vector<1x8x128xf32>
      tpu.vector_store %arg4[%c0_22, %c0_23, %c0_24], %61 {strides = array<i32>} : memref<1x8x128xf32, #tpu.memory_space<vmem>>, vector<1x8x128xf32>,
    } else {
    }
    return
  }
  func.func @transform_0(%arg0: i32, %arg1: i32) -> (i32, i32, i32) {
    %c1_i32 = arith.constant 1 : i32
    %0 = arith.muli %arg0, %c1_i32 : i32
    %1 = arith.addi %0, %arg1 : i32
    %c0_i32 = arith.constant 0 : i32
    %c0_i32_0 = arith.constant 0 : i32
    %c0_i32_1 = arith.constant 0 : i32
    return %c0_i32, %1, %c0_i32_0 : i32, i32, i32
  }
  func.func @transform_1(%arg0: i32, %arg1: i32) -> (i32, i32) {
    %c1_i32 = arith.constant 1 : i32
    %0 = arith.muli %arg0, %c1_i32 : i32
    %1 = arith.addi %0, %arg1 : i32
    %c0_i32 = arith.constant 0 : i32
    %c0_i32_0 = arith.constant 0 : i32
    return %1, %c0_i32 : i32, i32
  }
  func.func @transform_2(%arg0: i32, %arg1: i32) -> (i32, i32, i32) {
    %c0_i32 = arith.constant 0 : i32
    %c0_i32_0 = arith.constant 0 : i32
    %c0_i32_1 = arith.constant 0 : i32
    return %arg0, %c0_i32, %c0_i32_0 : i32, i32, i32
  }
}

</mosaic_0001>

<llo_original>
// kernel: tpu_custom_call.1
$region0: #{tpu_custom_call.1}
  #allocation0 [shape = 'u32[]', space=smem, size = 0x4, offset = 0x4, fixed_abs, tag = 'smem constant byte address 0x4 - core index']
  #allocation1 [shape = 'u32[72,128]{1,0:T(1,128)}', space=vmem, size = 0x9000, scoped, tag = 'internal scratch']
  #allocation2 [shape = 'f32[8,128]{1,0:T(8,128)}', space=vmem, size = 0x1000, scoped, tag = 'scratch operand']
  %s0 = inlined_call_operand.hbm [shape: f32[2,16,128], index: 0, kind: input, shape index: {}]
  %s1 = inlined_call_operand.hbm [shape: f32[16,128], index: 1, kind: input, shape index: {}]
  %s2 = inlined_call_operand.hbm [shape: f32[2,8,128], index: 2, kind: output, shape index: {}]
  %s3 = sld [smem:[#allocation0]]
  $region57: #{tpu_custom_call.1} parent=0
    _
  %s5 = ssub.s32 1, %s3
  %s6 = scalar_select 0, %s5, %s3
  $region1: #{tpu_custom_call.1} parent=0
    #allocation3 [shape = 'u8[16384]{0}', space=vmem, size = 0x4000, scoped, tag = 'input window, operand 0']
    #allocation4 [shape = 's32[2]{0}', space=sflag, size = 0x8, scoped, tag = 'scoped memory for tpu_custom_call.1']
    #allocation5 [shape = 's32[2]{0}', space=sflag, size = 0x8, scoped, tag = 'scoped memory for tpu_custom_call.1']
    #allocation6 [shape = 'u8[8192]{0}', space=vmem, size = 0x2000, scoped, tag = 'input window, operand 1']
    #allocation7 [shape = 's32[2]{0}', space=sflag, size = 0x8, scoped, tag = 'scoped memory for tpu_custom_call.1']
    #allocation8 [shape = 'u8[8192]{0}', space=vmem, size = 0x2000, scoped, tag = 'output window, operand 0']
    %7 = vsyncpa [#allocation4], 0
    %s8 = scalar_lea.sflag [#allocation4], 1
    %9 = vsyncpa %s8, 0
    %10 = vsyncpa [#allocation7], 0
    %s11 = scalar_lea.sflag [#allocation7], 1
    %12 = vsyncpa %s11, 0
    %13 = vsyncpa [#allocation5], 0
    %s14 = scalar_lea.sflag [#allocation5], 1
    %15 = vsyncpa %s14, 0
    loop: start=0, step=1, limit=4
    $region2: #{tpu_custom_call.1} parent=1 // loop_pre_header
      _
    $region3: #{tpu_custom_call.1} parent=1 // loop_header
      %s17 = sphi 0, %s21
      %p18 = scmp.ge.s32.totalorder %s17, 4
      %s24 = sphi 0, %s36
      %s25 = sphi 0, %s32
      %s26 = sphi 0, %s24
      %s27 = sphi 0, %s25
      %s28 = sphi 0, %s26
      %s29 = sphi 0, %s27
      %s41 = sphi 0, %s43
      %s44 = sphi 0, %s41
      %s45 = sphi 0, %s44
      %s61 = sphi 0, %s45
      %s69 = sphi 0, %s71
      %s72 = sphi 0, %s69
      %s73 = sphi 0, %s72
      %s89 = sphi 0, %s73
      %s95 = sphi 0, %s97
      %s98 = sphi 0, %s95
      %s99 = sphi 0, %s98
      %s115 = sphi 0, %s99
    $region4: #{tpu_custom_call.1} parent=1 // loop_header_branch
      %20 = sbr.rel (%p18) target = $region8
    $region5: #{tpu_custom_call.1} parent=1 // loop_body
      %s22 = ssub.s32 %s17, 1
      %s23 = ssub.s32 %s17, 2
      %s30 = sadd.s32 1, %s25
      %p31 = scmp.ge.s32.totalorder %s30, 1
      %s32 = scalar_select %p31, 0, %s30
      %s33 = sadd.s32 1, %s24
      %s34 = scalar_select %p31, %s33, %s24
      %p35 = scmp.ge.s32.totalorder %s34, 2
      %s36 = scalar_select %p35, 0, %s34
      %s37 = sadd.s32 %s24, %s25
      %s38 = sadd.s32 %s36, %s32
      %s39 = ssub.s32 %s37, %s38
      %p40 = scmp.eq.s32.totalorder %s39, 0
      %s42 = sadd.s32 %s41, 1
      %s43 = scalar_select %p40, %s41, %s42
      %p46 = pneg %p40
      %p47 = scmp.eq.s32.totalorder %s17, 1
      %p48 = por %p46, %p47
      %p49 = scmp.ne.s32.totalorder %s41, %s44
      %p50 = scmp.eq.s32.totalorder %s17, 0
      %p51 = por %p49, %p50
      %p52 = scmp.ne.s32.totalorder %s41, %s44
      %p53 = scmp.eq.s32.totalorder %s22, 1
      %p54 = por %p52, %p53
      %p55 = scmp.ne.s32.totalorder %s44, %s45
      %p56 = scmp.eq.s32.totalorder %s22, 0
      %p57 = por %p55, %p56
      %p58 = scmp.ne.s32.totalorder %s44, %s45
      %p59 = scmp.eq.s32.totalorder %s23, 1
      %p60 = por %p58, %p59
      %p62 = scmp.ne.s32.totalorder %s45, %s61
      %p63 = scmp.eq.s32.totalorder %s23, 0
      %p64 = por %p62, %p63
      %s65 = sadd.s32 %s24, %s25
      %s66 = sadd.s32 %s36, %s32
      %s67 = ssub.s32 %s65, %s66
      %p68 = scmp.eq.s32.totalorder %s67, 0
      %s70 = sadd.s32 %s69, 1
      %s71 = scalar_select %p68, %s69, %s70
      %p74 = pneg %p68
      %p75 = scmp.eq.s32.totalorder %s17, 1
      %p76 = por %p74, %p75
      %p77 = scmp.ne.s32.totalorder %s69, %s72
      %p78 = scmp.eq.s32.totalorder %s17, 0
      %p79 = por %p77, %p78
      %p80 = scmp.ne.s32.totalorder %s69, %s72
      %p81 = scmp.eq.s32.totalorder %s22, 1
      %p82 = por %p80, %p81
      %p83 = scmp.ne.s32.totalorder %s72, %s73
      %p84 = scmp.eq.s32.totalorder %s22, 0
      %p85 = por %p83, %p84
      %p86 = scmp.ne.s32.totalorder %s72, %s73
      %p87 = scmp.eq.s32.totalorder %s23, 1
      %p88 = por %p86, %p87
      %p90 = scmp.ne.s32.totalorder %s73, %s89
      %p91 = scmp.eq.s32.totalorder %s23, 0
      %p92 = por %p90, %p91
      %s93 = ssub.s32 %s24, %s36
      %p94 = scmp.eq.s32.totalorder %s93, 0
      %s96 = sadd.s32 %s95, 1
      %s97 = scalar_select %p94, %s95, %s96
      %p100 = pneg %p94
      %p101 = scmp.eq.s32.totalorder %s17, 1
      %p102 = por %p100, %p101
      %p103 = scmp.ne.s32.totalorder %s95, %s98
      %p104 = scmp.eq.s32.totalorder %s17, 0
      %p105 = por %p103, %p104
      %p106 = scmp.ne.s32.totalorder %s95, %s98
      %p107 = scmp.eq.s32.totalorder %s22, 1
      %p108 = por %p106, %p107
      %p109 = scmp.ne.s32.totalorder %s98, %s99
      %p110 = scmp.eq.s32.totalorder %s22, 0
      %p111 = por %p109, %p110
      %p112 = scmp.ne.s32.totalorder %s98, %s99
      %p113 = scmp.eq.s32.totalorder %s23, 1
      %p114 = por %p112, %p113
      %p116 = scmp.ne.s32.totalorder %s99, %s115
      %p117 = scmp.eq.s32.totalorder %s23, 0
      %p118 = por %p116, %p117
      %p119 = scmp.le.s32.totalorder 1, %s17
      %p120 = scmp.lt.s32.totalorder %s17, 3
      %p121 = pnand %p119, %p120
      %p122 = pneg %p121
      // Predicated region
      $region9: #{tpu_custom_call.1} parent=5 // pred_check
        _
      $region10: #{tpu_custom_call.1} parent=5 // pred_check_branch
        %124 = sbr.rel (%p121) target = $region12
      $region11: #{tpu_custom_call.1} parent=5 // pred_region
        %s125 = ssub.s32 %s17, 1
      $region12: #{tpu_custom_call.1} parent=5 // pred_fallthru
        _
      %p126 = scmp.lt.s32.totalorder %s17, 2
      // Predicated region
      $region13: #{tpu_custom_call.1} parent=5 // pred_check
        %p127 = pneg %p126
      $region14: #{tpu_custom_call.1} parent=5 // pred_check_branch
        %129 = sbr.rel (%p127) target = $region16
      $region15: #{tpu_custom_call.1} parent=5 // pred_region
        // Predicated region
        $region17: #{tpu_custom_call.1} parent=15 // pred_check
          %p130 = pneg %p51
        $region18: #{tpu_custom_call.1} parent=15 // pred_check_branch
          %132 = sbr.rel (%p130) target = $region20
        $region19: #{tpu_custom_call.1} parent=15 // pred_region
          %s133 = sand.u32 %s41, 1
          %s134 = scalar_lea.sflag [#allocation4], %s133
          %s135 = sand.u32 %s41, 1
          %s136 = smul.addr %s135, 16
          %s137 = scalar_lea.vmem [#allocation3], %s136
          %s138 = sadd.s32 %s24, %s25
          %140 = vsyncadd %s134, 0
          %s141 = smul.addr %s138, 8
          %s142 = scalar_lea.hbm %s0, %s141
          %s143 = sshll.u32 %s142, 4
          %s144 = int_to_ptr.hbm [resolvable:$true] %s143
          %s145 = sshll.u32 %s137, 4
          %s146 = int_to_ptr.vmem [resolvable:$true] %s145
          %151 = dma.hbm_to_vmem [thread:$0]  %s144, 256, %s146, %s134, 256, 128, 8
        $region20: #{tpu_custom_call.1} parent=15 // pred_fallthru
          _
        // Predicated region
        $region21: #{tpu_custom_call.1} parent=15 // pred_check
          %p152 = pneg %p79
        $region22: #{tpu_custom_call.1} parent=15 // pred_check_branch
          %154 = sbr.rel (%p152) target = $region24
        $region23: #{tpu_custom_call.1} parent=15 // pred_region
          %s155 = sand.u32 %s69, 1
          %s156 = scalar_lea.sflag [#allocation7], %s155
          %s157 = sand.u32 %s69, 1
          %s158 = smul.addr %s157, 8
          %s159 = scalar_lea.vmem [#allocation6], %s158
          %s160 = sadd.s32 %s24, %s25
          %162 = vsyncadd %s156, 0
          %s163 = smul.addr %s160, 8
          %s164 = scalar_lea.hbm %s1, %s163
          %s166 = sshll.u32 %s164, 4
          %s167 = int_to_ptr.hbm [resolvable:$true] %s166
          %s168 = sshll.u32 %s159, 4
          %s169 = int_to_ptr.vmem [resolvable:$true] %s168
          %171 = dma.hbm_to_vmem [thread:$0]  %s167, 128, %s169, %s156
        $region24: #{tpu_custom_call.1} parent=15 // pred_fallthru
          _
      $region16: #{tpu_custom_call.1} parent=5 // pred_fallthru
        _
      %p172 = scmp.le.s32.totalorder 1, %s17
      %p173 = scmp.lt.s32.totalorder %s17, 3
      %p174 = pnand %p172, %p173
      %p175 = pneg %p174
      // Predicated region
      $region25: #{tpu_custom_call.1} parent=5 // pred_check
        _
      $region26: #{tpu_custom_call.1} parent=5 // pred_check_branch
        %177 = sbr.rel (%p174) target = $region28
      $region27: #{tpu_custom_call.1} parent=5 // pred_region
        %s178 = ssub.s32 %s17, 1
        %s179 = sand.u32 %s44, 1
        %s180 = scalar_lea.sflag [#allocation4], %s179
        %s181 = sand.u32 %s44, 1
        %s182 = smul.addr %s181, 16
        %s183 = scalar_lea.vmem [#allocation3], %s182
        // Predicated region
        $region29: #{tpu_custom_call.1} parent=27 // pred_check
          %p184 = pneg %p57
        $region30: #{tpu_custom_call.1} parent=27 // pred_check_branch
          %186 = sbr.rel (%p184) target = $region32
        $region31: #{tpu_custom_call.1} parent=27 // pred_region
          %188 = dma.done %s180, 256
        $region32: #{tpu_custom_call.1} parent=27 // pred_fallthru
          _
        %s189 = sand.u32 %s72, 1
        %s190 = scalar_lea.sflag [#allocation7], %s189
        %s191 = sand.u32 %s72, 1
        %s192 = smul.addr %s191, 8
        %s193 = scalar_lea.vmem [#allocation6], %s192
        // Predicated region
        $region33: #{tpu_custom_call.1} parent=27 // pred_check
          %p194 = pneg %p85
        $region34: #{tpu_custom_call.1} parent=27 // pred_check_branch
          %196 = sbr.rel (%p194) target = $region36
        $region35: #{tpu_custom_call.1} parent=27 // pred_region
          %198 = dma.done %s190, 128
        $region36: #{tpu_custom_call.1} parent=27 // pred_fallthru
          _
        %s199 = sand.u32 %s44, 1
        %s200 = scalar_lea.sflag [#allocation4], %s199
        %s201 = sand.u32 %s44, 1
        %s202 = smul.addr %s201, 16
        %s203 = scalar_lea.vmem [#allocation3], %s202
        %p204 = pneg %p57
        %p205 = pneg %p54
        %s206 = sand.u32 %s72, 1
        %s207 = scalar_lea.sflag [#allocation7], %s206
        %s208 = sand.u32 %s72, 1
        %s209 = smul.addr %s208, 8
        %s210 = scalar_lea.vmem [#allocation6], %s209
        %p211 = pneg %p85
        %p212 = pneg %p82
        %p213 = pneg %p111
        %p214 = pneg %p108
        %s215 = sand.u32 %s98, 1
        %s216 = scalar_lea.sflag [#allocation5], %s215
        %s217 = sand.u32 %s98, 1
        %s218 = smul.addr %s217, 8
        %s219 = scalar_lea.vmem [#allocation8], %s218
        %s220 = sadd.s32 %s26, %s27
        %s221 = sadd.s32 %s26, %s27
        %p222 = scmp.eq.s32.totalorder %s27, 0
        // Predicated region
        $region37: #{tpu_custom_call.1} parent=27 // pred_check
          %p223 = pneg %p222
        $region38: #{tpu_custom_call.1} parent=27 // pred_check_branch
          %225 = sbr.rel (%p223) target = $region40
        $region39: #{tpu_custom_call.1} parent=27 // pred_region
          %226 = vst [vmem:[#allocation2] sm:$0xff] 0.0
        $region40: #{tpu_custom_call.1} parent=27 // pred_fallthru
          _
        %v227 = vld [vmem:[%s183] sm:$0xff]
        %v228 = vld [vmem:[%s183 + $0x8] sm:$0xff]
        %v229 = vld [vmem:[%s193] sm:$0xff]
        %vm230 = vcmp.gt.f32.partialorder %v229, 0.5
        %v231 = vmax.f32 %v227, %v228
        %v232 = vsub.f32 %v228, %v227
        %v233 = vand.u32 2147483647, %v232
        %v234 = vsub.f32 0.0, %v233
        %v235 = vmul.f32 %v234, 1.442695
        %v236 = vpow.pop %v235
        %v237 = vadd.f32 %v236, 1.0
        %v238 = vlog2.pop %v237
        %v239 = vmul.f32 %v238, 0.6931472
        %v240 = vadd.f32 %v231, %v239
        %v241 = vsel %vm230, %v228, %v227
        %v242 = vsub.f32 %v241, %v240
        %v243 = vmul.f32 %v242, 1.442695
        %v244 = vpow.pop %v243
        %v245 = vsel %vm230, 0.75, 0.25
        %v246 = vsub.f32 1.0, %v244
        %v247 = vmul.f32 %v246, %v246
        %v248 = vsub.f32 0.0, %v247
        %v249 = vmul.f32 %v242, %v245
        %v250 = vmul.f32 %v248, %v249
        %s251 = sadd.s32 %s26, %s27
        %s252 = smul.u32 %s251, 1024
        %v253 = vlaneseq
        %v254 = vshrl.u32 %v253, 7
        %v255 = vlaneseq
        %v256 = vand.u32 %v255, 127
        %v257 = vmul.u32 %v254, 128
        %v258 = vstv %s252
        %v259 = vadd.s32 %v258, %v257
        %v260 = vadd.s32 %v259, %v256
        %vm261 = vcmp.lt.s32.totalorder %v260, 120
        %v262 = vsel %vm261, %v250, 0.0
        %v263 = vld [vmem:[#allocation2] sm:$0xff]
        %v264 = vadd.f32 %v262, 0.0
        %v265 = vadd.f32 %v263, %v264
        %266 = vst [vmem:[#allocation2] sm:$0xff] %v265
        // Predicated region
        $region41: #{tpu_custom_call.1} parent=27 // pred_check
          %p267 = pneg %p222
        $region42: #{tpu_custom_call.1} parent=27 // pred_check_branch
          %269 = sbr.rel (%p267) target = $region44
        $region43: #{tpu_custom_call.1} parent=27 // pred_region
          %v270 = vld [vmem:[#allocation2] sm:$0xff]
          %271 = vst [vmem:[%s219] sm:$0xff] %v270
        $region44: #{tpu_custom_call.1} parent=27 // pred_fallthru
          _
        %s272 = sand.u32 %s98, 1
        %s273 = scalar_lea.sflag [#allocation5], %s272
        %s274 = sand.u32 %s98, 1
        %s275 = smul.addr %s274, 8
        %s276 = scalar_lea.vmem [#allocation8], %s275
        // Predicated region
        $region45: #{tpu_custom_call.1} parent=27 // pred_check
          %p277 = pneg %p108
        $region46: #{tpu_custom_call.1} parent=27 // pred_check_branch
          %279 = sbr.rel (%p277) target = $region48
        $region47: #{tpu_custom_call.1} parent=27 // pred_region
          %281 = vsyncadd %s273, 0
          %s282 = smul.addr %s26, 8
          %s283 = scalar_lea.hbm %s2, %s282
          %s285 = sshll.u32 %s276, 4
          %s286 = int_to_ptr.vmem [resolvable:$true] %s285
          %s287 = sshll.u32 %s283, 4
          %s288 = int_to_ptr.hbm [resolvable:$true] %s287
          %290 = dma.vmem_to_hbm [thread:$0]  %s286, 128, %s288, %s273
        $region48: #{tpu_custom_call.1} parent=27 // pred_fallthru
          _
      $region28: #{tpu_custom_call.1} parent=5 // pred_fallthru
        _
      %p291 = scmp.le.s32.totalorder 2, %s17
      // Predicated region
      $region49: #{tpu_custom_call.1} parent=5 // pred_check
        %p292 = pneg %p291
      $region50: #{tpu_custom_call.1} parent=5 // pred_check_branch
        %294 = sbr.rel (%p292) target = $region52
      $region51: #{tpu_custom_call.1} parent=5 // pred_region
        %s295 = ssub.s32 %s17, 2
        // Predicated region
        $region53: #{tpu_custom_call.1} parent=51 // pred_check
          %p296 = pneg %p114
        $region54: #{tpu_custom_call.1} parent=51 // pred_check_branch
          %298 = sbr.rel (%p296) target = $region56
        $region55: #{tpu_custom_call.1} parent=51 // pred_region
          %s299 = sand.u32 %s99, 1
          %s300 = scalar_lea.sflag [#allocation5], %s299
          %s301 = sand.u32 %s99, 1
          %s302 = smul.addr %s301, 8
          %s303 = scalar_lea.vmem [#allocation8], %s302
          %305 = dma.done %s300, 128
        $region56: #{tpu_custom_call.1} parent=51 // pred_fallthru
          _
      $region52: #{tpu_custom_call.1} parent=5 // pred_fallthru
        _
    $region6: #{tpu_custom_call.1} parent=1 // loop_footer
      %s21 = sadd.s32 1, %s17
    $region7: #{tpu_custom_call.1} parent=1 // loop_footer_branch
      %16 = sbr.rel target = $region3
    $region8: #{tpu_custom_call.1} parent=1 // loop_exit
      _
    %306 = vsyncpa [#allocation4], 1
    %s307 = scalar_lea.sflag [#allocation4], 1
    %308 = vsyncpa %s307, 1
    %309 = vsyncpa [#allocation7], 1
    %s310 = scalar_lea.sflag [#allocation7], 1
    %311 = vsyncpa %s310, 1
    %312 = vsyncpa [#allocation5], 1
    %s313 = scalar_lea.sflag [#allocation5], 1
    %314 = vsyncpa %s313, 1

</llo_original>
